<compile_context>
chip_gen: v6e
topology: v6e:2x2x1
jax: 0.10.0
libtpu: 0.0.40
codegen_flags: <defaults>
</compile_context>

<pallas_src>
import jax
import jax.numpy as jnp
from jax.experimental import pallas as pl
from jax.experimental.pallas import tpu as pltpu
import numpy as np


def _make_neumf_kernel(depth, k_gmf, n_chunks, sub_chunk):
    """Fused NeuMF forward for a fixed combined-tower depth.

    Ref order: 1 activation slab, the packed dense params (see pack_neumf_params),
    then the (1, TB) output ref.  The layer chain is replayed per `sub_chunk`-row
    slice of the TB block so intermediates live in vregs, not VMEM.
    """

    def kernel(a_ref, *rest):
        out_ref = rest[-1]
        f32 = jnp.float32

        # Load the packed dense params once (small; spills, if any, are cheap).
        it = iter(r[...] for r in rest[:-1])
        w0, b0 = next(it), next(it)
        tower_wb = [(next(it), next(it)) for _ in range(depth - 1)]
        wh_g, wh_c, bh = next(it), next(it), next(it)
        head_wb = [(next(it), next(it)) for _ in range(3)]
        w4, b4 = next(it), next(it)          # (1, 8), (1, 1)

        # Statically unrolled row-chunk loop (== lax.fori_loop(..., unroll=True) with
        # literal indices, which keeps every store offset static / lane-dense).
        for c in range(n_chunks):
            r0 = c * sub_chunk
            a = a_ref[r0:r0 + sub_chunk, :]                        # (SC, A)

            # ---- GMF branch (elementwise on the VPU).
            gmf = a[:, :k_gmf] * a[:, k_gmf:2 * k_gmf]             # (SC, k_gmf)

            # ---- combined towers, depth 0: one stacked dot over the whole slab
            #      (gmf rows of w0 are zero, so they contribute exactly nothing).
            z = jnp.maximum(
                jnp.dot(a, w0, preferred_element_type=f32) + b0, 0.0)

            # ---- remaining tower depths: one block-diagonal dot per depth.
            for (w, b) in tower_wb:
                z = jnp.maximum(
                    jnp.dot(z, w, preferred_element_type=f32) + b, 0.0)

            # ---- head h split by [gmf | combined towers] rows (no concat needed).
            x = (jnp.dot(gmf, wh_g, preferred_element_type=f32)
                 + jnp.dot(z, wh_c, preferred_element_type=f32)
                 + bh)

            # ---- hn1..hn3: x = Linear(relu(x)).
            for (w, b) in head_wb:
                x = jnp.dot(jnp.maximum(x, 0.0), w,
                            preferred_element_type=f32) + b

            # ---- hn4 (8 -> 1), computed transposed so batch lands on the lane axis
            #      and the store is lane-dense: y[0, b] = sum_k w4[0, k]*x[b, k] + b4.
            x = jnp.maximum(x, 0.0)                                # (SC, 8)
            y = jax.lax.dot_general(w4, x, (((1,), (1,)), ((), ())),
                                    preferred_element_type=f32)    # (1, SC)
            out_ref[:, r0:r0 + sub_chunk] = (y + b4).astype(out_ref.dtype)

    return kernel


def pack_neumf_params(params):
    """One-time packing: pre-transpose, split, and block-diagonalize all weights.

    Runs outside the serving path so the per-call wrapper does no weight reshaping.

    NOTE: shorter towers are extended with identity blocks + zero bias through the
    extra ReLU depths.  This is EXACT only because every tower layer ends in ReLU
    (outputs are >= 0, so relu(I @ z) == z).  If any tower ever ends with a linear
    layer or a different activation, this packing would silently change results.
    """
    fc, ft, tx = params["fc"], params["feat"], params["txt"]
    head = params["head"]
    k_gmf = params["P_gmf"].shape[1]
    k_mlp = params["P_mlp"].shape[1]
    assert len(fc) >= 1 and len(ft) >= 1 and len(tx) >= 1, \
        "each tower needs at least one (ReLU) layer for the identity-block packing"

    n_features = ft[0][0].shape[1]
    n_txt = tx[0][0].shape[1]
    fc_w = [w.shape[0] for (w, _) in fc]
    ft_w = [w.shape[0] for (w, _) in ft]
    tx_w = [w.shape[0] for (w, _) in tx]
    depth = max(len(fc), len(ft), len(tx))

    def width(ws, d):
        return ws[d] if d < len(ws) else ws[-1]

    dense = []

    # ---- depth 0: one stacked weight over the whole activation slab
    #      [pu_gmf | qi_gmf | pu_mlp | qi_mlp | features | txt]  (gmf rows are zero).
    A = 2 * k_gmf + 2 * k_mlp + n_features + n_txt
    w_fc0, w_ft0, w_tx0 = fc_w[0], ft_w[0], tx_w[0]
    tot0 = w_fc0 + w_ft0 + w_tx0
    W0 = jnp.zeros((A, tot0), jnp.float32)
    r = 2 * k_gmf
    W0 = W0.at[r:r + 2 * k_mlp, :w_fc0].set(fc[0][0].T)
    r += 2 * k_mlp
    W0 = W0.at[r:r + n_features, w_fc0:w_fc0 + w_ft0].set(ft[0][0].T)
    r += n_features
    W0 = W0.at[r:r + n_txt, w_fc0 + w_ft0:].set(tx[0][0].T)
    b0 = jnp.concatenate([fc[0][1], ft[0][1], tx[0][1]]).reshape(1, tot0)
    dense += [W0, b0]

    # ---- depth 1..D-1: block-diagonal weight per depth; towers that already ended
    #      get an identity block + zero bias (exact: their activations are >= 0).
    for d in range(1, depth):
        blocks, biases = [], []
        for tower, ws in ((fc, fc_w), (ft, ft_w), (tx, tx_w)):
            w_in = width(ws, d - 1)
            if d < len(tower):
                blocks.append(tower[d][0].T)               # (w_in, w_out)
                biases.append(tower[d][1])
            else:
                blocks.append(jnp.eye(w_in, dtype=jnp.float32))
                biases.append(jnp.zeros((w_in,), jnp.float32))
        tot_in = sum(b.shape[0] for b in blocks)
        tot_out = sum(b.shape[1] for b in blocks)
        W = jnp.zeros((tot_in, tot_out), jnp.float32)
        rr = cc = 0
        for blk in blocks:
            W = W.at[rr:rr + blk.shape[0], cc:cc + blk.shape[1]].set(blk)
            rr += blk.shape[0]
            cc += blk.shape[1]
        dense += [W, jnp.concatenate(biases).reshape(1, tot_out)]

    # ---- head h: split rows into [gmf | mlp, feat, txt] (same order as the
    #      reference concat, which matches the combined-tower column order).
    hW, hb = head[0]
    hWt = hW.T
    dense += [hWt[:k_gmf], hWt[k_gmf:], hb.reshape(1, -1)]

    # ---- hn1..hn3: plain pre-transposed Linear weights.
    for (w, b) in head[1:4]:
        dense += [w.T, b.reshape(1, -1)]

    # ---- hn4: keep torch (1, 8) layout; kernel runs it transposed (lane-dense out).
    w4, b4 = head[4]
    dense += [w4, b4.reshape(1, 1)]

    return {
        "P_gmf": params["P_gmf"], "Q_gmf": params["Q_gmf"],
        "P_mlp": params["P_mlp"], "Q_mlp": params["Q_mlp"],
        "dense": tuple(dense), "depth": depth, "k_gmf": k_gmf,
    }


def _round_up(x, m):
    return ((x + m - 1) // m) * m


def _pick_chunk(tb):
    """Sub-chunk size for the in-kernel row loop (keeps intermediates in vregs)."""
    if tb <= 128:
        return tb
    for cand in (128, 64, 32, 16, 8):
        if tb % cand == 0:
            return cand
    return tb


def neumf_forward(user_idx, item_idx, features, txt, packed,
                  tb_max=1024, single_tile_max=256):
    dense = packed["dense"]
    depth = packed["depth"]
    k_gmf = packed["k_gmf"]

    # Embedding row gathers (data-dependent) stay as JAX glue.
    # TODO(synk): for small demo tables the gathers could be fused via a one-hot
    # matmul against VMEM-resident P/Q tables; keep XLA gathers for real table sizes.
    pu_gmf = jnp.take(packed["P_gmf"], user_idx, axis=0)
    qi_gmf = jnp.take(packed["Q_gmf"], item_idx, axis=0)
    pu_mlp = jnp.take(packed["P_mlp"], user_idx, axis=0)
    qi_mlp = jnp.take(packed["Q_mlp"], item_idx, axis=0)

    # Single host-side concat -> one lane-dense activation slab, one DMA stream.
    acts = jnp.concatenate(
        [pu_gmf, qi_gmf, pu_mlp, qi_mlp,
         features.astype(jnp.float32), txt.astype(jnp.float32)], axis=1
    ).astype(jnp.float32)
    B, A = acts.shape

    # Tile selection:
    #  * tiny batch  -> one full-block tile (no padding waste),
    #  * medium      -> >= 2 tiles so v7x's two TensorCores both get work
    #                   (padding bounded by < 2*128 rows),
    #  * large       -> tb_max-row tiles (multiple of 128 -> legal multi-tile blocks).
    B8 = _round_up(B, 8)
    if B8 <= single_tile_max:
        TB = B8
    elif B8 <= tb_max:
        TB = min(tb_max, _round_up(pl.cdiv(B8, 2), 128))
    else:
        TB = tb_max
    B_pad = _round_up(B8, TB)
    num_tiles = B_pad // TB
    SC = _pick_chunk(TB)
    n_chunks = TB // SC

    acts = jnp.pad(acts, ((0, B_pad - B), (0, 0)))

    in_specs = (
        [pl.BlockSpec((TB, A), lambda i: (i, 0))]
        + [pl.BlockSpec(w.shape, lambda i: (0, 0)) for w in dense]  # VMEM-resident
    )
    out_specs = pl.BlockSpec((1, TB), lambda i: (0, i))             # lane-dense row

    out = pl.pallas_call(
        _make_neumf_kernel(depth, k_gmf, n_chunks, SC),
        out_shape=jax.ShapeDtypeStruct((1, B_pad), jnp.float32),
        grid=(num_tiles,),
        in_specs=in_specs,
        out_specs=out_specs,
        compiler_params=pltpu.CompilerParams(
            dimension_semantics=("parallel",),
            vmem_limit_bytes=32 * 1024 * 1024,
        ),
    )(acts, *dense)

    return out[0, :B].reshape(B, 1)


def neumf_reference(user_idx, item_idx, features, txt, params):
    """Pure-JAX reference mirroring the PyTorch forward exactly."""
    pu_gmf = jnp.take(params["P_gmf"], user_idx, axis=0)
    qi_gmf = jnp.take(params["Q_gmf"], item_idx, axis=0)
    gmf = pu_gmf * qi_gmf
    pu_mlp = jnp.take(params["P_mlp"], user_idx, axis=0)
    qi_mlp = jnp.take(params["Q_mlp"], item_idx, axis=0)
    mlp = jnp.concatenate([pu_mlp, qi_mlp], axis=1)
    for (w, b) in params["fc"]:
        mlp = jax.nn.relu(mlp @ w.T + b)
    feat = features
    for (w, b) in params["feat"]:
        feat = jax.nn.relu(feat @ w.T + b)
    tx = txt
    for (w, b) in params["txt"]:
        tx = jax.nn.relu(tx @ w.T + b)
    x = jnp.concatenate([gmf, mlp, feat, tx], axis=1)
    head = params["head"]
    w, b = head[0]
    x = x @ w.T + b
    for (w, b) in head[1:]:
        x = jax.nn.relu(x) @ w.T + b
    return x


def _init_linear(key, n_in, n_out):
    kw, kb = jax.random.split(key)
    w = 0.01 * jax.random.normal(kw, (n_out, n_in), jnp.float32)
    bound = 1.0 / np.sqrt(n_in)
    b = jax.random.uniform(kb, (n_out,), jnp.float32, -bound, bound)
    return (w, b)


if __name__ == "__main__":
    # Module hyperparameters (small, consistent with the forward pass).
    n_users, n_items = 32, 32
    k_gmf, k_mlp = 8, 8
    layers = [32, 16]
    n_features, features_layers = 8, [16, 8]
    n_txt, txt_layers = 16, [16, 8]

    key = jax.random.PRNGKey(0)
    keys = iter(jax.random.split(key, 64))

    params = {
        "P_gmf": 0.01 * jax.random.normal(next(keys), (n_users, k_gmf), jnp.float32),
        "Q_gmf": 0.01 * jax.random.normal(next(keys), (n_items, k_gmf), jnp.float32),
        "P_mlp": 0.01 * jax.random.normal(next(keys), (n_users, k_mlp), jnp.float32),
        "Q_mlp": 0.01 * jax.random.normal(next(keys), (n_items, k_mlp), jnp.float32),
    }

    fc = []
    n_in = k_mlp * 2
    for n_out in layers:
        fc.append(_init_linear(next(keys), n_in, n_out))
        n_in = n_out
    feat_ls = []
    n_in = n_features
    for n_out in features_layers:
        feat_ls.append(_init_linear(next(keys), n_in, n_out))
        n_in = n_out
    txt_ls = []
    n_in = n_txt
    for n_out in txt_layers:
        txt_ls.append(_init_linear(next(keys), n_in, n_out))
        n_in = n_out
    head_in = layers[-1] + k_gmf + features_layers[-1] + txt_layers[-1]
    head = [
        _init_linear(next(keys), head_in, 64),
        _init_linear(next(keys), 64, 32),
        _init_linear(next(keys), 32, 16),
        _init_linear(next(keys), 16, 8),
        _init_linear(next(keys), 8, 1),
    ]
    params.update({"fc": fc, "feat": feat_ls, "txt": txt_ls, "head": head})

    # One-time packing (pre-transpose / split / block-diag) outside the serving path.
    packed = pack_neumf_params(params)

    # Deterministic example inputs; exercise both the tiny single-tile path (B=8)
    # and the multi-tile / multi-chunk path (B=300 -> 2 tiles x 2 row-chunks).
    for B in (8, 300):
        user_idx = jax.random.randint(next(keys), (B,), 0, n_users, jnp.int32)
        item_idx = jax.random.randint(next(keys), (B,), 0, n_items, jnp.int32)
        features = jax.random.normal(next(keys), (B, n_features), jnp.float32)
        txt = jax.random.normal(next(keys), (B, n_txt), jnp.float32)

        out = neumf_forward(user_idx, item_idx, features, txt, packed)
        out = jax.block_until_ready(out)

        ref = neumf_reference(user_idx, item_idx, features, txt, params)
        np.testing.assert_allclose(np.asarray(out), np.asarray(ref),
                                   rtol=1e-5, atol=1e-5)

    print("KERNEL_OK")
</pallas_src>

<mosaic_0001>
module attributes {stable_mosaic.version = 11 : i64} {
  func.func @kernel(%arg0: i32, %arg1: memref<8x56xf32, #tpu.memory_space<vmem>>, %arg2: memref<56x64xf32, #tpu.memory_space<vmem>>, %arg3: memref<1x64xf32, #tpu.memory_space<vmem>>, %arg4: memref<64x32xf32, #tpu.memory_space<vmem>>, %arg5: memref<1x32xf32, #tpu.memory_space<vmem>>, %arg6: memref<8x64xf32, #tpu.memory_space<vmem>>, %arg7: memref<32x64xf32, #tpu.memory_space<vmem>>, %arg8: memref<1x64xf32, #tpu.memory_space<vmem>>, %arg9: memref<64x32xf32, #tpu.memory_space<vmem>>, %arg10: memref<1x32xf32, #tpu.memory_space<vmem>>, %arg11: memref<32x16xf32, #tpu.memory_space<vmem>>, %arg12: memref<1x16xf32, #tpu.memory_space<vmem>>, %arg13: memref<16x8xf32, #tpu.memory_space<vmem>>, %arg14: memref<1x8xf32, #tpu.memory_space<vmem>>, %arg15: memref<1x8xf32, #tpu.memory_space<vmem>>, %arg16: memref<1x1xf32, #tpu.memory_space<vmem>>, %arg17: memref<1x8xf32, #tpu.memory_space<vmem>>) attributes {dimension_semantics = [#tpu.dimension_semantics<parallel>], iteration_bounds = array<i64: 1>, scalar_prefetch = 0 : i64, scratch_operands = 0 : i64, tpu.core_type = #tpu.core_type<tc>, window_params = [{transform_indices = @transform_0, window_bounds = array<i64: 8, 56>}, {pipeline_mode = #tpu.pipeline_mode<synchronous>, transform_indices = @transform_1, window_bounds = array<i64: 56, 64>}, {pipeline_mode = #tpu.pipeline_mode<synchronous>, transform_indices = @transform_2, window_bounds = array<i64: 1, 64>}, {pipeline_mode = #tpu.pipeline_mode<synchronous>, transform_indices = @transform_3, window_bounds = array<i64: 64, 32>}, {pipeline_mode = #tpu.pipeline_mode<synchronous>, transform_indices = @transform_4, window_bounds = array<i64: 1, 32>}, {pipeline_mode = #tpu.pipeline_mode<synchronous>, transform_indices = @transform_5, window_bounds = array<i64: 8, 64>}, {pipeline_mode = #tpu.pipeline_mode<synchronous>, transform_indices = @transform_6, window_bounds = array<i64: 32, 64>}, {pipeline_mode = #tpu.pipeline_mode<synchronous>, transform_indices = @transform_7, window_bounds = array<i64: 1, 64>}, {pipeline_mode = #tpu.pipeline_mode<synchronous>, transform_indices = @transform_8, window_bounds = array<i64: 64, 32>}, {pipeline_mode = #tpu.pipeline_mode<synchronous>, transform_indices = @transform_9, window_bounds = array<i64: 1, 32>}, {pipeline_mode = #tpu.pipeline_mode<synchronous>, transform_indices = @transform_10, window_bounds = array<i64: 32, 16>}, {pipeline_mode = #tpu.pipeline_mode<synchronous>, transform_indices = @transform_11, window_bounds = array<i64: 1, 16>}, {pipeline_mode = #tpu.pipeline_mode<synchronous>, transform_indices = @transform_12, window_bounds = array<i64: 16, 8>}, {pipeline_mode = #tpu.pipeline_mode<synchronous>, transform_indices = @transform_13, window_bounds = array<i64: 1, 8>}, {pipeline_mode = #tpu.pipeline_mode<synchronous>, transform_indices = @transform_14, window_bounds = array<i64: 1, 8>}, {pipeline_mode = #tpu.pipeline_mode<synchronous>, transform_indices = @transform_15, window_bounds = array<i64: 1, 1>}, {transform_indices = @transform_16, window_bounds = array<i64: 1, 8>}]} {
    %c0 = arith.constant 0 : index
    %c0_0 = arith.constant 0 : index
    %0 = vector.load %arg2[%c0, %c0_0] : memref<56x64xf32, #tpu.memory_space<vmem>>, vector<56x64xf32>
    %c0_1 = arith.constant 0 : index
    %c0_2 = arith.constant 0 : index
    %1 = vector.load %arg3[%c0_1, %c0_2] : memref<1x64xf32, #tpu.memory_space<vmem>>, vector<1x64xf32>
    %c0_3 = arith.constant 0 : index
    %c0_4 = arith.constant 0 : index
    %2 = vector.load %arg4[%c0_3, %c0_4] : memref<64x32xf32, #tpu.memory_space<vmem>>, vector<64x32xf32>
    %c0_5 = arith.constant 0 : index
    %c0_6 = arith.constant 0 : index
    %3 = vector.load %arg5[%c0_5, %c0_6] : memref<1x32xf32, #tpu.memory_space<vmem>>, vector<1x32xf32>
    %c0_7 = arith.constant 0 : index
    %c0_8 = arith.constant 0 : index
    %4 = vector.load %arg6[%c0_7, %c0_8] : memref<8x64xf32, #tpu.memory_space<vmem>>, vector<8x64xf32>
    %c0_9 = arith.constant 0 : index
    %c0_10 = arith.constant 0 : index
    %5 = vector.load %arg7[%c0_9, %c0_10] : memref<32x64xf32, #tpu.memory_space<vmem>>, vector<32x64xf32>
    %c0_11 = arith.constant 0 : index
    %c0_12 = arith.constant 0 : index
    %6 = vector.load %arg8[%c0_11, %c0_12] : memref<1x64xf32, #tpu.memory_space<vmem>>, vector<1x64xf32>
    %c0_13 = arith.constant 0 : index
    %c0_14 = arith.constant 0 : index
    %7 = vector.load %arg9[%c0_13, %c0_14] : memref<64x32xf32, #tpu.memory_space<vmem>>, vector<64x32xf32>
    %c0_15 = arith.constant 0 : index
    %c0_16 = arith.constant 0 : index
    %8 = vector.load %arg10[%c0_15, %c0_16] : memref<1x32xf32, #tpu.memory_space<vmem>>, vector<1x32xf32>
    %c0_17 = arith.constant 0 : index
    %c0_18 = arith.constant 0 : index
    %9 = vector.load %arg11[%c0_17, %c0_18] : memref<32x16xf32, #tpu.memory_space<vmem>>, vector<32x16xf32>
    %c0_19 = arith.constant 0 : index
    %c0_20 = arith.constant 0 : index
    %10 = vector.load %arg12[%c0_19, %c0_20] : memref<1x16xf32, #tpu.memory_space<vmem>>, vector<1x16xf32>
    %c0_21 = arith.constant 0 : index
    %c0_22 = arith.constant 0 : index
    %11 = vector.load %arg13[%c0_21, %c0_22] : memref<16x8xf32, #tpu.memory_space<vmem>>, vector<16x8xf32>
    %c0_23 = arith.constant 0 : index
    %c0_24 = arith.constant 0 : index
    %12 = vector.load %arg14[%c0_23, %c0_24] : memref<1x8xf32, #tpu.memory_space<vmem>>, vector<1x8xf32>
    %c0_25 = arith.constant 0 : index
    %c0_26 = arith.constant 0 : index
    %13 = vector.load %arg15[%c0_25, %c0_26] : memref<1x8xf32, #tpu.memory_space<vmem>>, vector<1x8xf32>
    %c0_27 = arith.constant 0 : index
    %c0_28 = arith.constant 0 : index
    %14 = vector.load %arg16[%c0_27, %c0_28] : memref<1x1xf32, #tpu.memory_space<vmem>>, vector<1x1xf32>
    %c0_29 = arith.constant 0 : index
    %c0_30 = arith.constant 0 : index
    %15 = vector.load %arg1[%c0_29, %c0_30] : memref<8x56xf32, #tpu.memory_space<vmem>>, vector<8x56xf32>
    %16 = vector.extract_strided_slice %15 {offsets = [0, 0], sizes = [8, 8], strides = [1, 1]} : vector<8x56xf32> to vector<8x8xf32>
    %17 = vector.extract_strided_slice %15 {offsets = [0, 8], sizes = [8, 8], strides = [1, 1]} : vector<8x56xf32> to vector<8x8xf32>
    %18 = arith.mulf %16, %17 : vector<8x8xf32>
    %cst = arith.constant dense<0.000000e+00> : vector<8x64xf32>
    %19 = tpu.matmul %15, %0, %cst {dimension_numbers = #tpu.dot_dimension_numbers<[1], [0], [0], [1], [0, 0, 1, 1], [], []>} : vector<8x56xf32>, vector<56x64xf32>, vector<8x64xf32> -> vector<8x64xf32>
    %20 = vector.broadcast %1 : vector<1x64xf32> to vector<8x64xf32>
    %21 = arith.addf %19, %20 : vector<8x64xf32>
    %cst_31 = arith.constant 0.000000e+00 : f32
    %22 = vector.broadcast %cst_31 : f32 to vector<8x64xf32>
    %23 = arith.maximumf %21, %22 : vector<8x64xf32>
    %cst_32 = arith.constant dense<0.000000e+00> : vector<8x32xf32>
    %24 = tpu.matmul %23, %2, %cst_32 {dimension_numbers = #tpu.dot_dimension_numbers<[1], [0], [0], [1], [0, 0, 1, 1], [], []>} : vector<8x64xf32>, vector<64x32xf32>, vector<8x32xf32> -> vector<8x32xf32>
    %25 = vector.broadcast %3 : vector<1x32xf32> to vector<8x32xf32>
    %26 = arith.addf %24, %25 : vector<8x32xf32>
    %cst_33 = arith.constant 0.000000e+00 : f32
    %27 = vector.broadcast %cst_33 : f32 to vector<8x32xf32>
    %28 = arith.maximumf %26, %27 : vector<8x32xf32>
    %cst_34 = arith.constant dense<0.000000e+00> : vector<8x64xf32>
    %29 = tpu.matmul %18, %4, %cst_34 {dimension_numbers = #tpu.dot_dimension_numbers<[1], [0], [0], [1], [0, 0, 1, 1], [], []>} : vector<8x8xf32>, vector<8x64xf32>, vector<8x64xf32> -> vector<8x64xf32>
    %cst_35 = arith.constant dense<0.000000e+00> : vector<8x64xf32>
    %30 = tpu.matmul %28, %5, %cst_35 {dimension_numbers = #tpu.dot_dimension_numbers<[1], [0], [0], [1], [0, 0, 1, 1], [], []>} : vector<8x32xf32>, vector<32x64xf32>, vector<8x64xf32> -> vector<8x64xf32>
    %31 = arith.addf %29, %30 : vector<8x64xf32>
    %32 = vector.broadcast %6 : vector<1x64xf32> to vector<8x64xf32>
    %33 = arith.addf %31, %32 : vector<8x64xf32>
    %cst_36 = arith.constant 0.000000e+00 : f32
    %34 = vector.broadcast %cst_36 : f32 to vector<8x64xf32>
    %35 = arith.maximumf %33, %34 : vector<8x64xf32>
    %cst_37 = arith.constant dense<0.000000e+00> : vector<8x32xf32>
    %36 = tpu.matmul %35, %7, %cst_37 {dimension_numbers = #tpu.dot_dimension_numbers<[1], [0], [0], [1], [0, 0, 1, 1], [], []>} : vector<8x64xf32>, vector<64x32xf32>, vector<8x32xf32> -> vector<8x32xf32>
    %37 = vector.broadcast %8 : vector<1x32xf32> to vector<8x32xf32>
    %38 = arith.addf %36, %37 : vector<8x32xf32>
    %cst_38 = arith.constant 0.000000e+00 : f32
    %39 = vector.broadcast %cst_38 : f32 to vector<8x32xf32>
    %40 = arith.maximumf %38, %39 : vector<8x32xf32>
    %cst_39 = arith.constant dense<0.000000e+00> : vector<8x16xf32>
    %41 = tpu.matmul %40, %9, %cst_39 {dimension_numbers = #tpu.dot_dimension_numbers<[1], [0], [0], [1], [0, 0, 1, 1], [], []>} : vector<8x32xf32>, vector<32x16xf32>, vector<8x16xf32> -> vector<8x16xf32>
    %42 = vector.broadcast %10 : vector<1x16xf32> to vector<8x16xf32>
    %43 = arith.addf %41, %42 : vector<8x16xf32>
    %cst_40 = arith.constant 0.000000e+00 : f32
    %44 = vector.broadcast %cst_40 : f32 to vector<8x16xf32>
    %45 = arith.maximumf %43, %44 : vector<8x16xf32>
    %cst_41 = arith.constant dense<0.000000e+00> : vector<8x8xf32>
    %46 = tpu.matmul %45, %11, %cst_41 {dimension_numbers = #tpu.dot_dimension_numbers<[1], [0], [0], [1], [0, 0, 1, 1], [], []>} : vector<8x16xf32>, vector<16x8xf32>, vector<8x8xf32> -> vector<8x8xf32>
    %47 = vector.broadcast %12 : vector<1x8xf32> to vector<8x8xf32>
    %48 = arith.addf %46, %47 : vector<8x8xf32>
    %cst_42 = arith.constant 0.000000e+00 : f32
    %49 = vector.broadcast %cst_42 : f32 to vector<8x8xf32>
    %50 = arith.maximumf %48, %49 : vector<8x8xf32>
    %cst_43 = arith.constant dense<0.000000e+00> : vector<1x8xf32>
    %51 = tpu.matmul %13, %50, %cst_43 {dimension_numbers = #tpu.dot_dimension_numbers<[1], [1], [0], [0], [0, 0, 1, 0], [], []>} : vector<1x8xf32>, vector<8x8xf32>, vector<1x8xf32> -> vector<1x8xf32>
    %52 = vector.broadcast %14 : vector<1x1xf32> to vector<1x8xf32>
    %53 = arith.addf %51, %52 : vector<1x8xf32>
    %c0_44 = arith.constant 0 : index
    %c0_45 = arith.constant 0 : index
    %54 = vector.load %arg17[%c0_44, %c0_45] : memref<1x8xf32, #tpu.memory_space<vmem>>, vector<1x8xf32>
    tpu.vector_store %arg17[%c0_44, %c0_45], %53 {strides = array<i32>} : memref<1x8xf32, #tpu.memory_space<vmem>>, vector<1x8xf32>,
    return
  }
  func.func @transform_0(%arg0: i32) -> (i32, i32) {
    %c0_i32 = arith.constant 0 : i32
    %c0_i32_0 = arith.constant 0 : i32
    return %arg0, %c0_i32 : i32, i32
  }
  func.func @transform_1(%arg0: i32) -> (i32, i32) {
    %c0_i32 = arith.constant 0 : i32
    %c0_i32_0 = arith.constant 0 : i32
    %c0_i32_1 = arith.constant 0 : i32
    return %c0_i32, %c0_i32_0 : i32, i32
  }
  func.func @transform_2(%arg0: i32) -> (i32, i32) {
    %c0_i32 = arith.constant 0 : i32
    %c0_i32_0 = arith.constant 0 : i32
    %c0_i32_1 = arith.constant 0 : i32
    return %c0_i32, %c0_i32_0 : i32, i32
  }
  func.func @transform_3(%arg0: i32) -> (i32, i32) {
    %c0_i32 = arith.constant 0 : i32
    %c0_i32_0 = arith.constant 0 : i32
    %c0_i32_1 = arith.constant 0 : i32
    return %c0_i32, %c0_i32_0 : i32, i32
  }
  func.func @transform_4(%arg0: i32) -> (i32, i32) {
    %c0_i32 = arith.constant 0 : i32
    %c0_i32_0 = arith.constant 0 : i32
    %c0_i32_1 = arith.constant 0 : i32
    return %c0_i32, %c0_i32_0 : i32, i32
  }
  func.func @transform_5(%arg0: i32) -> (i32, i32) {
    %c0_i32 = arith.constant 0 : i32
    %c0_i32_0 = arith.constant 0 : i32
    %c0_i32_1 = arith.constant 0 : i32
    return %c0_i32, %c0_i32_0 : i32, i32
  }
  func.func @transform_6(%arg0: i32) -> (i32, i32) {
    %c0_i32 = arith.constant 0 : i32
    %c0_i32_0 = arith.constant 0 : i32
    %c0_i32_1 = arith.constant 0 : i32
    return %c0_i32, %c0_i32_0 : i32, i32
  }
  func.func @transform_7(%arg0: i32) -> (i32, i32) {
    %c0_i32 = arith.constant 0 : i32
    %c0_i32_0 = arith.constant 0 : i32
    %c0_i32_1 = arith.constant 0 : i32
    return %c0_i32, %c0_i32_0 : i32, i32
  }
  func.func @transform_8(%arg0: i32) -> (i32, i32) {
    %c0_i32 = arith.constant 0 : i32
    %c0_i32_0 = arith.constant 0 : i32
    %c0_i32_1 = arith.constant 0 : i32
    return %c0_i32, %c0_i32_0 : i32, i32
  }
  func.func @transform_9(%arg0: i32) -> (i32, i32) {
    %c0_i32 = arith.constant 0 : i32
    %c0_i32_0 = arith.constant 0 : i32
    %c0_i32_1 = arith.constant 0 : i32
    return %c0_i32, %c0_i32_0 : i32, i32
  }
  func.func @transform_10(%arg0: i32) -> (i32, i32) {
    %c0_i32 = arith.constant 0 : i32
    %c0_i32_0 = arith.constant 0 : i32
    %c0_i32_1 = arith.constant 0 : i32
    return %c0_i32, %c0_i32_0 : i32, i32
  }
  func.func @transform_11(%arg0: i32) -> (i32, i32) {
    %c0_i32 = arith.constant 0 : i32
    %c0_i32_0 = arith.constant 0 : i32
    %c0_i32_1 = arith.constant 0 : i32
    return %c0_i32, %c0_i32_0 : i32, i32
  }
  func.func @transform_12(%arg0: i32) -> (i32, i32) {
    %c0_i32 = arith.constant 0 : i32
    %c0_i32_0 = arith.constant 0 : i32
    %c0_i32_1 = arith.constant 0 : i32
    return %c0_i32, %c0_i32_0 : i32, i32
  }
  func.func @transform_13(%arg0: i32) -> (i32, i32) {
    %c0_i32 = arith.constant 0 : i32
    %c0_i32_0 = arith.constant 0 : i32
    %c0_i32_1 = arith.constant 0 : i32
    return %c0_i32, %c0_i32_0 : i32, i32
  }
  func.func @transform_14(%arg0: i32) -> (i32, i32) {
    %c0_i32 = arith.constant 0 : i32
    %c0_i32_0 = arith.constant 0 : i32
    %c0_i32_1 = arith.constant 0 : i32
    return %c0_i32, %c0_i32_0 : i32, i32
  }
  func.func @transform_15(%arg0: i32) -> (i32, i32) {
    %c0_i32 = arith.constant 0 : i32
    %c0_i32_0 = arith.constant 0 : i32
    %c0_i32_1 = arith.constant 0 : i32
    return %c0_i32, %c0_i32_0 : i32, i32
  }
  func.func @transform_16(%arg0: i32) -> (i32, i32) {
    %c0_i32 = arith.constant 0 : i32
    %c0_i32_0 = arith.constant 0 : i32
    return %c0_i32, %arg0 : i32, i32
  }
}

</mosaic_0001>

<llo_original>
// kernel: tpu_custom_call.1
$region0: #{tpu_custom_call.1}
  #allocation0 [shape = 'u32[]', space=smem, size = 0x4, offset = 0x4, fixed_abs, tag = 'smem constant byte address 0x4 - core index']
  #allocation1 [shape = 'u32[144,128]{1,0:T(1,128)}', space=vmem, size = 0x12000, scoped, tag = 'internal scratch']
  #allocation2 [shape = 'f32[1,1]{1,0:T(1,128)S(1)}', space=vmem, size = 0x200, scoped, tag = 'scoped memory for tpu_custom_call.1']
  %s0 = inlined_call_operand.vmem [shape: f32[8,56], index: 0, kind: input, shape index: {}]
  %s1 = inlined_call_operand.vmem [shape: f32[56,64], index: 1, kind: input, shape index: {}]
  %s2 = inlined_call_operand.vmem [shape: f32[1,64], index: 2, kind: input, shape index: {}]
  %s3 = inlined_call_operand.vmem [shape: f32[64,32], index: 3, kind: input, shape index: {}]
  %s4 = inlined_call_operand.vmem [shape: f32[1,32], index: 4, kind: input, shape index: {}]
  %s5 = inlined_call_operand.vmem [shape: f32[8,64], index: 5, kind: input, shape index: {}]
  %s6 = inlined_call_operand.vmem [shape: f32[32,64], index: 6, kind: input, shape index: {}]
  %s7 = inlined_call_operand.vmem [shape: f32[1,64], index: 7, kind: input, shape index: {}]
  %s8 = inlined_call_operand.vmem [shape: f32[64,32], index: 8, kind: input, shape index: {}]
  %s9 = inlined_call_operand.vmem [shape: f32[1,32], index: 9, kind: input, shape index: {}]
  %s10 = inlined_call_operand.vmem [shape: f32[32,16], index: 10, kind: input, shape index: {}]
  %s11 = inlined_call_operand.vmem [shape: f32[1,16], index: 11, kind: input, shape index: {}]
  %s12 = inlined_call_operand.vmem [shape: f32[16,8], index: 12, kind: input, shape index: {}]
  %s13 = inlined_call_operand.vmem [shape: f32[1,8], index: 13, kind: input, shape index: {}]
  %s14 = inlined_call_operand.vmem [shape: f32[1,8], index: 14, kind: input, shape index: {}]
  %s15 = inlined_call_operand.<no memory space> [shape: f32[1,1], index: 15, kind: input, shape index: {}]
  %s16 = inlined_call_operand.hbm [shape: f32[1,8], index: 16, kind: output, shape index: {}]
  %s17 = sld [smem:[#allocation0]]
  $region74: #{tpu_custom_call.1} parent=0
    _
  %s19 = ssub.s32 1, %s17
  %s20 = scalar_select 0, %s19, %s17
  %v21 = vstv %s15
  %22 = vst [vmem:[#allocation2] sm:$0x1] %v21
  $region1: #{tpu_custom_call.1} parent=0
    #allocation3 [shape = 'u8[512]{0}', space=vmem, size = 0x400, scoped, tag = 'output window, operand 0, single buffered']
    #allocation4 [shape = 's32[1]{0}', space=sflag, size = 0x4, scoped, tag = 'scoped memory for tpu_custom_call.1']
    %23 = vsyncpa [#allocation4], 0
    // Predicated region
    $region2: #{tpu_custom_call.1} parent=1 // pred_check
      _
    $region3: #{tpu_custom_call.1} parent=1 // pred_check_branch
      %25 = sbr.rel (0) target = $region5
    $region4: #{tpu_custom_call.1} parent=1 // pred_region
      _
    $region5: #{tpu_custom_call.1} parent=1 // pred_fallthru
      _
    // Predicated region
    $region6: #{tpu_custom_call.1} parent=1 // pred_check
      _
    $region7: #{tpu_custom_call.1} parent=1 // pred_check_branch
      %27 = sbr.rel (0) target = $region9
    $region8: #{tpu_custom_call.1} parent=1 // pred_region
      _
    $region9: #{tpu_custom_call.1} parent=1 // pred_fallthru
      _
    // Predicated region
    $region10: #{tpu_custom_call.1} parent=1 // pred_check
      _
    $region11: #{tpu_custom_call.1} parent=1 // pred_check_branch
      %29 = sbr.rel (0) target = $region13
    $region12: #{tpu_custom_call.1} parent=1 // pred_region
      _
    $region13: #{tpu_custom_call.1} parent=1 // pred_fallthru
      _
    // Predicated region
    $region14: #{tpu_custom_call.1} parent=1 // pred_check
      _
    $region15: #{tpu_custom_call.1} parent=1 // pred_check_branch
      %31 = sbr.rel (0) target = $region17
    $region16: #{tpu_custom_call.1} parent=1 // pred_region
      _
    $region17: #{tpu_custom_call.1} parent=1 // pred_fallthru
      _
    // Predicated region
    $region18: #{tpu_custom_call.1} parent=1 // pred_check
      _
    $region19: #{tpu_custom_call.1} parent=1 // pred_check_branch
      %33 = sbr.rel (0) target = $region21
    $region20: #{tpu_custom_call.1} parent=1 // pred_region
      _
    $region21: #{tpu_custom_call.1} parent=1 // pred_fallthru
      _
    // Predicated region
    $region22: #{tpu_custom_call.1} parent=1 // pred_check
      _
    $region23: #{tpu_custom_call.1} parent=1 // pred_check_branch
      %35 = sbr.rel (0) target = $region25
    $region24: #{tpu_custom_call.1} parent=1 // pred_region
      _
    $region25: #{tpu_custom_call.1} parent=1 // pred_fallthru
      _
    // Predicated region
    $region26: #{tpu_custom_call.1} parent=1 // pred_check
      _
    $region27: #{tpu_custom_call.1} parent=1 // pred_check_branch
      %37 = sbr.rel (0) target = $region29
    $region28: #{tpu_custom_call.1} parent=1 // pred_region
      _
    $region29: #{tpu_custom_call.1} parent=1 // pred_fallthru
      _
    // Predicated region
    $region30: #{tpu_custom_call.1} parent=1 // pred_check
      _
    $region31: #{tpu_custom_call.1} parent=1 // pred_check_branch
      %39 = sbr.rel (0) target = $region33
    $region32: #{tpu_custom_call.1} parent=1 // pred_region
      _
    $region33: #{tpu_custom_call.1} parent=1 // pred_fallthru
      _
    // Predicated region
    $region34: #{tpu_custom_call.1} parent=1 // pred_check
      _
    $region35: #{tpu_custom_call.1} parent=1 // pred_check_branch
      %41 = sbr.rel (0) target = $region37
    $region36: #{tpu_custom_call.1} parent=1 // pred_region
      _
    $region37: #{tpu_custom_call.1} parent=1 // pred_fallthru
      _
    // Predicated region
    $region38: #{tpu_custom_call.1} parent=1 // pred_check
      _
    $region39: #{tpu_custom_call.1} parent=1 // pred_check_branch
      %43 = sbr.rel (0) target = $region41
    $region40: #{tpu_custom_call.1} parent=1 // pred_region
      _
    $region41: #{tpu_custom_call.1} parent=1 // pred_fallthru
      _
    // Predicated region
    $region42: #{tpu_custom_call.1} parent=1 // pred_check
      _
    $region43: #{tpu_custom_call.1} parent=1 // pred_check_branch
      %45 = sbr.rel (0) target = $region45
    $region44: #{tpu_custom_call.1} parent=1 // pred_region
      _
    $region45: #{tpu_custom_call.1} parent=1 // pred_fallthru
      _
    // Predicated region
    $region46: #{tpu_custom_call.1} parent=1 // pred_check
      _
    $region47: #{tpu_custom_call.1} parent=1 // pred_check_branch
      %47 = sbr.rel (0) target = $region49
    $region48: #{tpu_custom_call.1} parent=1 // pred_region
      _
    $region49: #{tpu_custom_call.1} parent=1 // pred_fallthru
      _
    // Predicated region
    $region50: #{tpu_custom_call.1} parent=1 // pred_check
      _
    $region51: #{tpu_custom_call.1} parent=1 // pred_check_branch
      %49 = sbr.rel (0) target = $region53
    $region52: #{tpu_custom_call.1} parent=1 // pred_region
      _
    $region53: #{tpu_custom_call.1} parent=1 // pred_fallthru
      _
    // Predicated region
    $region54: #{tpu_custom_call.1} parent=1 // pred_check
      _
    $region55: #{tpu_custom_call.1} parent=1 // pred_check_branch
      %51 = sbr.rel (0) target = $region57
    $region56: #{tpu_custom_call.1} parent=1 // pred_region
      _
    $region57: #{tpu_custom_call.1} parent=1 // pred_fallthru
      _
    // Predicated region
    $region58: #{tpu_custom_call.1} parent=1 // pred_check
      _
    $region59: #{tpu_custom_call.1} parent=1 // pred_check_branch
      %53 = sbr.rel (0) target = $region61
    $region60: #{tpu_custom_call.1} parent=1 // pred_region
      _
    $region61: #{tpu_custom_call.1} parent=1 // pred_fallthru
      _
    // Predicated region
    $region62: #{tpu_custom_call.1} parent=1 // pred_check
      _
    $region63: #{tpu_custom_call.1} parent=1 // pred_check_branch
      %55 = sbr.rel (0) target = $region65
    $region64: #{tpu_custom_call.1} parent=1 // pred_region
      _
    $region65: #{tpu_custom_call.1} parent=1 // pred_fallthru
      _
    %v56 = vld [vmem:[%s1] sm:$0xff]
    %v57 = vld [vmem:[%s1 + $0x8] sm:$0xff]
    %v58 = vld [vmem:[%s1 + $0x10] sm:$0xff]
    %v59 = vld [vmem:[%s1 + $0x18] sm:$0xff]
    %v60 = vld [vmem:[%s1 + $0x20] sm:$0xff]
    %v61 = vld [vmem:[%s1 + $0x28] sm:$0xff]
    %v62 = vld [vmem:[%s1 + $0x30] sm:$0xff]
    %v63 = vld [vmem:[%s2] sm:$0x1]
    %v64 = vld [vmem:[%s3] sm:$0xff]
    %v65 = vld [vmem:[%s3 + $0x8] sm:$0xff]
    %v66 = vld [vmem:[%s3 + $0x10] sm:$0xff]
    %v67 = vld [vmem:[%s3 + $0x18] sm:$0xff]
    %v68 = vld [vmem:[%s3 + $0x20] sm:$0xff]
    %v69 = vld [vmem:[%s3 + $0x28] sm:$0xff]
    %v70 = vld [vmem:[%s3 + $0x30] sm:$0xff]
    %v71 = vld [vmem:[%s3 + $0x38] sm:$0xff]
    %v72 = vld [vmem:[%s4] sm:$0x1]
    %v73 = vld [vmem:[%s5] sm:$0xff]
    %v74 = vld [vmem:[%s6] sm:$0xff]
    %v75 = vld [vmem:[%s6 + $0x8] sm:$0xff]
    %v76 = vld [vmem:[%s6 + $0x10] sm:$0xff]
    %v77 = vld [vmem:[%s6 + $0x18] sm:$0xff]
    %v78 = vld [vmem:[%s7] sm:$0x1]
    %v79 = vld [vmem:[%s8] sm:$0xff]
    %v80 = vld [vmem:[%s8 + $0x8] sm:$0xff]
    %v81 = vld [vmem:[%s8 + $0x10] sm:$0xff]
    %v82 = vld [vmem:[%s8 + $0x18] sm:$0xff]
    %v83 = vld [vmem:[%s8 + $0x20] sm:$0xff]
    %v84 = vld [vmem:[%s8 + $0x28] sm:$0xff]
    %v85 = vld [vmem:[%s8 + $0x30] sm:$0xff]
    %v86 = vld [vmem:[%s8 + $0x38] sm:$0xff]
    %v87 = vld [vmem:[%s9] sm:$0x1]
    %v88 = vld [vmem:[%s10] sm:$0xff]
    %v89 = vld [vmem:[%s10 + $0x8] sm:$0xff]
    %v90 = vld [vmem:[%s10 + $0x10] sm:$0xff]
    %v91 = vld [vmem:[%s10 + $0x18] sm:$0xff]
    %v92 = vld [vmem:[%s11] sm:$0x1]
    %v93 = vld [vmem:[%s12] sm:$0xff]
    %v94 = vld [vmem:[%s12 + $0x8] sm:$0xff]
    %v95 = vld [vmem:[%s13] sm:$0x1]
    %v96 = vld [vmem:[%s14] sm:$0x1]
    %v97 = vld [vmem:[#allocation2] sm:$0x1]
    %v98 = vld [vmem:[%s0] sm:$0xff]
    %100 = vrot.lane.b32.xlu0 %v98, 120
    %v101 = vpop.permute.xlu0 %100
    %v103 = vmul.f32 %v98, %v101
    %v105 = vlaneseq
    %v106 = vshrl.u32 %v105, 7
    %v107 = vsub.s32 0, %v106
    %v108 = vrot.slane %v63, %v107
    %vm110 = vcmask 457728
    %v111 = vsel %vm110, %v98, 0
    %113 = vmatprep.subr.mxu0 0.0
    %114 = vmatpush1.msra.mxu0 0.0
    %115 = vmatprep.subr.mxu0 0.0
    %116 = vmatpush1.msra.mxu0 0.0
    %117 = vmatprep.subr.mxu0 0.0
    %118 = vmatpush1.msra.mxu0 0.0
    %119 = vmatprep.subr.mxu0 0.0
    %120 = vmatpush1.msra.mxu0 0.0
    %121 = vmatprep.subr.mxu0 0.0
    %122 = vmatpush1.msra.mxu0 0.0
    %123 = vmatprep.subr.mxu0 0.0
    %124 = vmatpush1.msra.mxu0 0.0
    %125 = vmatprep.subr.mxu0 0.0
    %126 = vmatpush1.msra.mxu0 0.0
    %127 = vmatprep.subr.mxu0 0.0
    %128 = vmatpush1.msra.mxu0 0.0
    %129 = vmatprep.subr.mxu0 0.0
    %130 = vmatpush1.msra.mxu0 0.0
    %131 = vmatprep.subr.mxu0 0.0
    %132 = vmatpush1.msra.mxu0 %v62
    %133 = vmatprep.subr.mxu0 0.0
    %134 = vmatpush1.msra.mxu0 %v61
    %135 = vmatprep.subr.mxu0 0.0
    %136 = vmatpush1.msra.mxu0 %v60
    %137 = vmatprep.subr.mxu0 0.0
    %138 = vmatpush1.msra.mxu0 %v59
    %139 = vmatprep.subr.mxu0 0.0
    %140 = vmatpush1.msra.mxu0 %v58
    %141 = vmatprep.subr.mxu0 0.0
    %142 = vmatpush1.msra.mxu0 %v57
    %143 = vmatprep.subr.mxu0 0.0
    %144 = vmatpush1.msra.mxu0 %v56
    %145 = vmatprep.subr.mxu0 0.0
    %146 = vmatpush2.msra.mxu0 0.0
    %147 = vmatprep.subr.mxu0 0.0
    %148 = vmatpush2.msra.mxu0 0.0
    %149 = vmatprep.subr.mxu0 0.0
    %150 = vmatpush2.msra.mxu0 0.0
    %151 = vmatprep.subr.mxu0 0.0
    %152 = vmatpush2.msra.mxu0 0.0
    %153 = vmatprep.subr.mxu0 0.0
    %154 = vmatpush2.msra.mxu0 0.0
    %155 = vmatprep.subr.mxu0 0.0
    %156 = vmatpush2.msra.mxu0 0.0
    %157 = vmatprep.subr.mxu0 0.0
    %158 = vmatpush2.msra.mxu0 0.0
    %159 = vmatprep.subr.mxu0 0.0
    %160 = vmatpush2.msra.mxu0 0.0
    %161 = vmatprep.subr.mxu0 0.0
    %162 = vmatpush2.msra.mxu0 0.0
    %163 = vmatprep.subr.mxu0 0.0
    %164 = vmatpush2.msra.mxu0 0.0
    %165 = vmatprep.subr.mxu0 0.0
    %166 = vmatpush2.msra.mxu0 0.0
    %167 = vmatprep.subr.mxu0 0.0
    %168 = vmatpush2.msra.mxu0 0.0
    %169 = vmatprep.subr.mxu0 0.0
    %170 = vmatpush2.msra.mxu0 0.0
    %171 = vmatprep.subr.mxu0 0.0
    %172 = vmatpush2.msra.mxu0 0.0
    %173 = vmatprep.subr.mxu0 0.0
    %174 = vmatpush2.msra.mxu0 0.0
    %175 = vmatprep.subr.mxu0 0.0
    %176 = vmatpush2.msra.mxu0 0.0
    %177 = vmatprep.mubr.f32.mxu0 0.0
    %178 = vmatmul.mubr.f32.gmra.mxu0 %v111
    %v179 = vpop.f32.mrf.mxu0
    %v180 = vadd.f32 %v108, %v179
    %v181 = vpop.f32.mrf.mxu0
    %182 = vdwg.mxu0
    %v183 = vmax.f32 %v180, 0.0
    %v185 = vlaneseq
    %v186 = vshrl.u32 %v185, 7
    %v187 = vsub.s32 0, %v186
    %v188 = vrot.slane %v72, %v187
    %vm190 = vcmask 523264
    %v192 = vsel %vm190, %v183, 0
    %194 = vmatprep.subr.mxu0 0.0
    %195 = vmatpush1.msra.mxu0 0.0
    %196 = vmatprep.subr.mxu0 0.0
    %197 = vmatpush1.msra.mxu0 0.0
    %198 = vmatprep.subr.mxu0 0.0
    %199 = vmatpush1.msra.mxu0 0.0
    %200 = vmatprep.subr.mxu0 0.0
    %201 = vmatpush1.msra.mxu0 0.0
    %202 = vmatprep.subr.mxu0 0.0
    %203 = vmatpush1.msra.mxu0 0.0
    %204 = vmatprep.subr.mxu0 0.0
    %205 = vmatpush1.msra.mxu0 0.0
    %206 = vmatprep.subr.mxu0 0.0
    %207 = vmatpush1.msra.mxu0 0.0
    %208 = vmatprep.subr.mxu0 0.0
    %209 = vmatpush1.msra.mxu0 0.0
    %210 = vmatprep.subr.mxu0 0.0
    %211 = vmatpush1.msra.mxu0 %v71
    %212 = vmatprep.subr.mxu0 0.0
    %213 = vmatpush1.msra.mxu0 %v70
    %214 = vmatprep.subr.mxu0 0.0
    %215 = vmatpush1.msra.mxu0 %v69
    %216 = vmatprep.subr.mxu0 0.0
    %217 = vmatpush1.msra.mxu0 %v68
    %218 = vmatprep.subr.mxu0 0.0
    %219 = vmatpush1.msra.mxu0 %v67
    %220 = vmatprep.subr.mxu0 0.0
    %221 = vmatpush1.msra.mxu0 %v66
    %222 = vmatprep.subr.mxu0 0.0
    %223 = vmatpush1.msra.mxu0 %v65
    %224 = vmatprep.subr.mxu0 0.0
    %225 = vmatpush1.msra.mxu0 %v64
    %226 = vmatprep.subr.mxu0 0.0
    %227 = vmatpush2.msra.mxu0 0.0
    %228 = vmatprep.subr.mxu0 0.0
    %229 = vmatpush2.msra.mxu0 0.0
    %230 = vmatprep.subr.mxu0 0.0
    %231 = vmatpush2.msra.mxu0 0.0
    %232 = vmatprep.subr.mxu0 0.0
    %233 = vmatpush2.msra.mxu0 0.0
    %234 = vmatprep.subr.mxu0 0.0
    %235 = vmatpush2.msra.mxu0 0.0
    %236 = vmatprep.subr.mxu0 0.0
    %237 = vmatpush2.msra.mxu0 0.0
    %238 = vmatprep.subr.mxu0 0.0
    %239 = vmatpush2.msra.mxu0 0.0
    %240 = vmatprep.subr.mxu0 0.0
    %241 = vmatpush2.msra.mxu0 0.0
    %242 = vmatprep.subr.mxu0 0.0
    %243 = vmatpush2.msra.mxu0 0.0
    %244 = vmatprep.subr.mxu0 0.0
    %245 = vmatpush2.msra.mxu0 0.0
    %246 = vmatprep.subr.mxu0 0.0
    %247 = vmatpush2.msra.mxu0 0.0
    %248 = vmatprep.subr.mxu0 0.0
    %249 = vmatpush2.msra.mxu0 0.0
    %250 = vmatprep.subr.mxu0 0.0
    %251 = vmatpush2.msra.mxu0 0.0
    %252 = vmatprep.subr.mxu0 0.0
    %253 = vmatpush2.msra.mxu0 0.0
    %254 = vmatprep.subr.mxu0 0.0
    %255 = vmatpush2.msra.mxu0 0.0
    %256 = vmatprep.subr.mxu0 0.0
    %257 = vmatpush2.msra.mxu0 0.0
    %258 = vmatprep.mubr.f32.mxu0 0.0
    %259 = vmatmul.mubr.f32.gmra.mxu0 %v192
    %v260 = vpop.f32.mrf.mxu0
    %v261 = vadd.f32 %v188, %v260
    %v262 = vpop.f32.mrf.mxu0
    %263 = vdwg.mxu0
    %v264 = vmax.f32 %v261, 0.0
    %vm265 = vcmask 261120
    %v267 = vsel %vm265, %v264, 0
    %269 = vmatprep.subr.mxu0 0.0
    %270 = vmatpush1.msra.mxu0 0.0
    %271 = vmatprep.subr.mxu0 0.0
    %272 = vmatpush1.msra.mxu0 0.0
    %273 = vmatprep.subr.mxu0 0.0
    %274 = vmatpush1.msra.mxu0 0.0
    %275 = vmatprep.subr.mxu0 0.0
    %276 = vmatpush1.msra.mxu0 0.0
    %277 = vmatprep.subr.mxu0 0.0
    %278 = vmatpush1.msra.mxu0 0.0
    %279 = vmatprep.subr.mxu0 0.0
    %280 = vmatpush1.msra.mxu0 0.0
    %281 = vmatprep.subr.mxu0 0.0
    %282 = vmatpush1.msra.mxu0 0.0
    %283 = vmatprep.subr.mxu0 0.0
    %284 = vmatpush1.msra.mxu0 0.0
    %285 = vmatprep.subr.mxu0 0.0
    %286 = vmatpush1.msra.mxu0 0.0
    %287 = vmatprep.subr.mxu0 0.0
    %288 = vmatpush1.msra.mxu0 0.0
    %289 = vmatprep.subr.mxu0 0.0
    %290 = vmatpush1.msra.mxu0 0.0
    %291 = vmatprep.subr.mxu0 0.0
    %292 = vmatpush1.msra.mxu0 0.0
    %293 = vmatprep.subr.mxu0 0.0
    %294 = vmatpush1.msra.mxu0 %v77
    %295 = vmatprep.subr.mxu0 0.0
    %296 = vmatpush1.msra.mxu0 %v76
    %297 = vmatprep.subr.mxu0 0.0
    %298 = vmatpush1.msra.mxu0 %v75
    %299 = vmatprep.subr.mxu0 0.0
    %300 = vmatpush1.msra.mxu0 %v74
    %301 = vmatprep.subr.mxu0 0.0
    %302 = vmatpush2.msra.mxu0 0.0
    %303 = vmatprep.subr.mxu0 0.0
    %304 = vmatpush2.msra.mxu0 0.0
    %305 = vmatprep.subr.mxu0 0.0
    %306 = vmatpush2.msra.mxu0 0.0
    %307 = vmatprep.subr.mxu0 0.0
    %308 = vmatpush2.msra.mxu0 0.0
    %309 = vmatprep.subr.mxu0 0.0
    %310 = vmatpush2.msra.mxu0 0.0
    %311 = vmatprep.subr.mxu0 0.0
    %312 = vmatpush2.msra.mxu0 0.0
    %313 = vmatprep.subr.mxu0 0.0
    %314 = vmatpush2.msra.mxu0 0.0
    %315 = vmatprep.subr.mxu0 0.0
    %316 = vmatpush2.msra.mxu0 0.0
    %317 = vmatprep.subr.mxu0 0.0
    %318 = vmatpush2.msra.mxu0 0.0
    %319 = vmatprep.subr.mxu0 0.0
    %320 = vmatpush2.msra.mxu0 0.0
    %321 = vmatprep.subr.mxu0 0.0
    %322 = vmatpush2.msra.mxu0 0.0
    %323 = vmatprep.subr.mxu0 0.0
    %324 = vmatpush2.msra.mxu0 0.0
    %325 = vmatprep.subr.mxu0 0.0
    %326 = vmatpush2.msra.mxu0 0.0
    %327 = vmatprep.subr.mxu0 0.0
    %328 = vmatpush2.msra.mxu0 0.0
    %329 = vmatprep.subr.mxu0 0.0
    %330 = vmatpush2.msra.mxu0 0.0
    %331 = vmatprep.subr.mxu0 0.0
    %332 = vmatpush2.msra.mxu0 0.0
    %333 = vmatprep.mubr.f32.mxu0 0.0
    %334 = vmatmul.mubr.f32.gmra.mxu0 %v267
    %v335 = vpop.f32.mrf.mxu0
    %v336 = vadd.f32 0.0, %v335
    %v337 = vpop.f32.mrf.mxu0
    %338 = vdwg.mxu0
    %vm339 = vcmask 64512
    %v341 = vsel %vm339, %v103, 0
    %343 = vmatprep.subr.mxu0 0.0
    %344 = vmatpush1.msra.mxu0 0.0
    %345 = vmatprep.subr.mxu0 0.0
    %346 = vmatpush1.msra.mxu0 0.0
    %347 = vmatprep.subr.mxu0 0.0
    %348 = vmatpush1.msra.mxu0 0.0
    %349 = vmatprep.subr.mxu0 0.0
    %350 = vmatpush1.msra.mxu0 0.0
    %351 = vmatprep.subr.mxu0 0.0
    %352 = vmatpush1.msra.mxu0 0.0
    %353 = vmatprep.subr.mxu0 0.0
    %354 = vmatpush1.msra.mxu0 0.0
    %355 = vmatprep.subr.mxu0 0.0
    %356 = vmatpush1.msra.mxu0 0.0
    %357 = vmatprep.subr.mxu0 0.0
    %358 = vmatpush1.msra.mxu0 0.0
    %359 = vmatprep.subr.mxu0 0.0
    %360 = vmatpush1.msra.mxu0 0.0
    %361 = vmatprep.subr.mxu0 0.0
    %362 = vmatpush1.msra.mxu0 0.0
    %363 = vmatprep.subr.mxu0 0.0
    %364 = vmatpush1.msra.mxu0 0.0
    %365 = vmatprep.subr.mxu0 0.0
    %366 = vmatpush1.msra.mxu0 0.0
    %367 = vmatprep.subr.mxu0 0.0
    %368 = vmatpush1.msra.mxu0 0.0
    %369 = vmatprep.subr.mxu0 0.0
    %370 = vmatpush1.msra.mxu0 0.0
    %371 = vmatprep.subr.mxu0 0.0
    %372 = vmatpush1.msra.mxu0 0.0
    %373 = vmatprep.subr.mxu0 0.0
    %374 = vmatpush1.msra.mxu0 %v73
    %375 = vmatprep.subr.mxu0 0.0
    %376 = vmatpush2.msra.mxu0 0.0
    %377 = vmatprep.subr.mxu0 0.0
    %378 = vmatpush2.msra.mxu0 0.0
    %379 = vmatprep.subr.mxu0 0.0
    %380 = vmatpush2.msra.mxu0 0.0
    %381 = vmatprep.subr.mxu0 0.0
    %382 = vmatpush2.msra.mxu0 0.0
    %383 = vmatprep.subr.mxu0 0.0
    %384 = vmatpush2.msra.mxu0 0.0
    %385 = vmatprep.subr.mxu0 0.0
    %386 = vmatpush2.msra.mxu0 0.0
    %387 = vmatprep.subr.mxu0 0.0
    %388 = vmatpush2.msra.mxu0 0.0
    %389 = vmatprep.subr.mxu0 0.0
    %390 = vmatpush2.msra.mxu0 0.0
    %391 = vmatprep.subr.mxu0 0.0
    %392 = vmatpush2.msra.mxu0 0.0
    %393 = vmatprep.subr.mxu0 0.0
    %394 = vmatpush2.msra.mxu0 0.0
    %395 = vmatprep.subr.mxu0 0.0
    %396 = vmatpush2.msra.mxu0 0.0
    %397 = vmatprep.subr.mxu0 0.0
    %398 = vmatpush2.msra.mxu0 0.0
    %399 = vmatprep.subr.mxu0 0.0
    %400 = vmatpush2.msra.mxu0 0.0
    %401 = vmatprep.subr.mxu0 0.0
    %402 = vmatpush2.msra.mxu0 0.0
    %403 = vmatprep.subr.mxu0 0.0
    %404 = vmatpush2.msra.mxu0 0.0
    %405 = vmatprep.subr.mxu0 0.0
    %406 = vmatpush2.msra.mxu0 0.0
    %407 = vmatprep.mubr.f32.mxu0 0.0
    %408 = vmatmul.mubr.f32.gmra.mxu0 %v341
    %v409 = vpop.f32.mrf.mxu0
    %v410 = vadd.f32 %v336, %v409
    %v411 = vpop.f32.mrf.mxu0
    %412 = vdwg.mxu0
    %v414 = vlaneseq
    %v415 = vshrl.u32 %v414, 7
    %v416 = vsub.s32 0, %v415
    %v417 = vrot.slane %v78, %v416
    %v419 = vadd.f32 %v410, %v417
    %v420 = vmax.f32 %v419, 0.0
    %v422 = vlaneseq
    %v423 = vshrl.u32 %v422, 7
    %v424 = vsub.s32 0, %v423
    %v425 = vrot.slane %v87, %v424
    %v428 = vsel %vm190, %v420, 0
    %430 = vmatprep.subr.mxu0 0.0
    %431 = vmatpush1.msra.mxu0 0.0
    %432 = vmatprep.subr.mxu0 0.0
    %433 = vmatpush1.msra.mxu0 0.0
    %434 = vmatprep.subr.mxu0 0.0
    %435 = vmatpush1.msra.mxu0 0.0
    %436 = vmatprep.subr.mxu0 0.0
    %437 = vmatpush1.msra.mxu0 0.0
    %438 = vmatprep.subr.mxu0 0.0
    %439 = vmatpush1.msra.mxu0 0.0
    %440 = vmatprep.subr.mxu0 0.0
    %441 = vmatpush1.msra.mxu0 0.0
    %442 = vmatprep.subr.mxu0 0.0
    %443 = vmatpush1.msra.mxu0 0.0
    %444 = vmatprep.subr.mxu0 0.0
    %445 = vmatpush1.msra.mxu0 0.0
    %446 = vmatprep.subr.mxu0 0.0
    %447 = vmatpush1.msra.mxu0 %v86
    %448 = vmatprep.subr.mxu0 0.0
    %449 = vmatpush1.msra.mxu0 %v85
    %450 = vmatprep.subr.mxu0 0.0
    %451 = vmatpush1.msra.mxu0 %v84
    %452 = vmatprep.subr.mxu0 0.0
    %453 = vmatpush1.msra.mxu0 %v83
    %454 = vmatprep.subr.mxu0 0.0
    %455 = vmatpush1.msra.mxu0 %v82
    %456 = vmatprep.subr.mxu0 0.0
    %457 = vmatpush1.msra.mxu0 %v81
    %458 = vmatprep.subr.mxu0 0.0
    %459 = vmatpush1.msra.mxu0 %v80
    %460 = vmatprep.subr.mxu0 0.0
    %461 = vmatpush1.msra.mxu0 %v79
    %462 = vmatprep.subr.mxu0 0.0
    %463 = vmatpush2.msra.mxu0 0.0
    %464 = vmatprep.subr.mxu0 0.0
    %465 = vmatpush2.msra.mxu0 0.0
    %466 = vmatprep.subr.mxu0 0.0
    %467 = vmatpush2.msra.mxu0 0.0
    %468 = vmatprep.subr.mxu0 0.0
    %469 = vmatpush2.msra.mxu0 0.0
    %470 = vmatprep.subr.mxu0 0.0
    %471 = vmatpush2.msra.mxu0 0.0
    %472 = vmatprep.subr.mxu0 0.0
    %473 = vmatpush2.msra.mxu0 0.0
    %474 = vmatprep.subr.mxu0 0.0
    %475 = vmatpush2.msra.mxu0 0.0
    %476 = vmatprep.subr.mxu0 0.0
    %477 = vmatpush2.msra.mxu0 0.0
    %478 = vmatprep.subr.mxu0 0.0
    %479 = vmatpush2.msra.mxu0 0.0
    %480 = vmatprep.subr.mxu0 0.0
    %481 = vmatpush2.msra.mxu0 0.0
    %482 = vmatprep.subr.mxu0 0.0
    %483 = vmatpush2.msra.mxu0 0.0
    %484 = vmatprep.subr.mxu0 0.0
    %485 = vmatpush2.msra.mxu0 0.0
    %486 = vmatprep.subr.mxu0 0.0
    %487 = vmatpush2.msra.mxu0 0.0
    %488 = vmatprep.subr.mxu0 0.0
    %489 = vmatpush2.msra.mxu0 0.0
    %490 = vmatprep.subr.mxu0 0.0
    %491 = vmatpush2.msra.mxu0 0.0
    %492 = vmatprep.subr.mxu0 0.0
    %493 = vmatpush2.msra.mxu0 0.0
    %494 = vmatprep.mubr.f32.mxu0 0.0
    %495 = vmatmul.mubr.f32.gmra.mxu0 %v428
    %v496 = vpop.f32.mrf.mxu0
    %v497 = vadd.f32 %v425, %v496
    %v498 = vpop.f32.mrf.mxu0
    %499 = vdwg.mxu0
    %v500 = vmax.f32 %v497, 0.0
    %v502 = vlaneseq
    %v503 = vshrl.u32 %v502, 7
    %v504 = vsub.s32 0, %v503
    %v505 = vrot.slane %v92, %v504
    %v508 = vsel %vm265, %v500, 0
    %510 = vmatprep.subr.mxu0 0.0
    %511 = vmatpush1.msra.mxu0 0.0
    %512 = vmatprep.subr.mxu0 0.0
    %513 = vmatpush1.msra.mxu0 0.0
    %514 = vmatprep.subr.mxu0 0.0
    %515 = vmatpush1.msra.mxu0 0.0
    %516 = vmatprep.subr.mxu0 0.0
    %517 = vmatpush1.msra.mxu0 0.0
    %518 = vmatprep.subr.mxu0 0.0
    %519 = vmatpush1.msra.mxu0 0.0
    %520 = vmatprep.subr.mxu0 0.0
    %521 = vmatpush1.msra.mxu0 0.0
    %522 = vmatprep.subr.mxu0 0.0
    %523 = vmatpush1.msra.mxu0 0.0
    %524 = vmatprep.subr.mxu0 0.0
    %525 = vmatpush1.msra.mxu0 0.0
    %526 = vmatprep.subr.mxu0 0.0
    %527 = vmatpush1.msra.mxu0 0.0
    %528 = vmatprep.subr.mxu0 0.0
    %529 = vmatpush1.msra.mxu0 0.0
    %530 = vmatprep.subr.mxu0 0.0
    %531 = vmatpush1.msra.mxu0 0.0
    %532 = vmatprep.subr.mxu0 0.0
    %533 = vmatpush1.msra.mxu0 0.0
    %534 = vmatprep.subr.mxu0 0.0
    %535 = vmatpush1.msra.mxu0 %v91
    %536 = vmatprep.subr.mxu0 0.0
    %537 = vmatpush1.msra.mxu0 %v90
    %538 = vmatprep.subr.mxu0 0.0
    %539 = vmatpush1.msra.mxu0 %v89
    %540 = vmatprep.subr.mxu0 0.0
    %541 = vmatpush1.msra.mxu0 %v88
    %542 = vmatprep.subr.mxu0 0.0
    %543 = vmatpush2.msra.mxu0 0.0
    %544 = vmatprep.subr.mxu0 0.0
    %545 = vmatpush2.msra.mxu0 0.0
    %546 = vmatprep.subr.mxu0 0.0
    %547 = vmatpush2.msra.mxu0 0.0
    %548 = vmatprep.subr.mxu0 0.0
    %549 = vmatpush2.msra.mxu0 0.0
    %550 = vmatprep.subr.mxu0 0.0
    %551 = vmatpush2.msra.mxu0 0.0
    %552 = vmatprep.subr.mxu0 0.0
    %553 = vmatpush2.msra.mxu0 0.0
    %554 = vmatprep.subr.mxu0 0.0
    %555 = vmatpush2.msra.mxu0 0.0
    %556 = vmatprep.subr.mxu0 0.0
    %557 = vmatpush2.msra.mxu0 0.0
    %558 = vmatprep.subr.mxu0 0.0
    %559 = vmatpush2.msra.mxu0 0.0
    %560 = vmatprep.subr.mxu0 0.0
    %561 = vmatpush2.msra.mxu0 0.0
    %562 = vmatprep.subr.mxu0 0.0
    %563 = vmatpush2.msra.mxu0 0.0
    %564 = vmatprep.subr.mxu0 0.0
    %565 = vmatpush2.msra.mxu0 0.0
    %566 = vmatprep.subr.mxu0 0.0
    %567 = vmatpush2.msra.mxu0 0.0
    %568 = vmatprep.subr.mxu0 0.0
    %569 = vmatpush2.msra.mxu0 0.0
    %570 = vmatprep.subr.mxu0 0.0
    %571 = vmatpush2.msra.mxu0 0.0
    %572 = vmatprep.subr.mxu0 0.0
    %573 = vmatpush2.msra.mxu0 0.0
    %574 = vmatprep.mubr.f32.mxu0 0.0
    %575 = vmatmul.mubr.f32.gmra.mxu0 %v508
    %v576 = vpop.f32.mrf.mxu0
    %v577 = vadd.f32 %v505, %v576
    %v578 = vpop.f32.mrf.mxu0
    %579 = vdwg.mxu0
    %v580 = vmax.f32 %v577, 0.0
    %v582 = vlaneseq
    %v583 = vshrl.u32 %v582, 7
    %v584 = vsub.s32 0, %v583
    %v585 = vrot.slane %v95, %v584
    %vm587 = vcmask 130048
    %v589 = vsel %vm587, %v580, 0
    %591 = vmatprep.subr.mxu0 0.0
    %592 = vmatpush1.msra.mxu0 0.0
    %593 = vmatprep.subr.mxu0 0.0
    %594 = vmatpush1.msra.mxu0 0.0
    %595 = vmatprep.subr.mxu0 0.0
    %596 = vmatpush1.msra.mxu0 0.0
    %597 = vmatprep.subr.mxu0 0.0
    %598 = vmatpush1.msra.mxu0 0.0
    %599 = vmatprep.subr.mxu0 0.0
    %600 = vmatpush1.msra.mxu0 0.0
    %601 = vmatprep.subr.mxu0 0.0
    %602 = vmatpush1.msra.mxu0 0.0
    %603 = vmatprep.subr.mxu0 0.0
    %604 = vmatpush1.msra.mxu0 0.0
    %605 = vmatprep.subr.mxu0 0.0
    %606 = vmatpush1.msra.mxu0 0.0
    %607 = vmatprep.subr.mxu0 0.0
    %608 = vmatpush1.msra.mxu0 0.0
    %609 = vmatprep.subr.mxu0 0.0
    %610 = vmatpush1.msra.mxu0 0.0
    %611 = vmatprep.subr.mxu0 0.0
    %612 = vmatpush1.msra.mxu0 0.0
    %613 = vmatprep.subr.mxu0 0.0
    %614 = vmatpush1.msra.mxu0 0.0
    %615 = vmatprep.subr.mxu0 0.0
    %616 = vmatpush1.msra.mxu0 0.0
    %617 = vmatprep.subr.mxu0 0.0
    %618 = vmatpush1.msra.mxu0 0.0
    %619 = vmatprep.subr.mxu0 0.0
    %620 = vmatpush1.msra.mxu0 %v94
    %621 = vmatprep.subr.mxu0 0.0
    %622 = vmatpush1.msra.mxu0 %v93
    %623 = vmatprep.subr.mxu0 0.0
    %624 = vmatpush2.msra.mxu0 0.0
    %625 = vmatprep.subr.mxu0 0.0
    %626 = vmatpush2.msra.mxu0 0.0
    %627 = vmatprep.subr.mxu0 0.0
    %628 = vmatpush2.msra.mxu0 0.0
    %629 = vmatprep.subr.mxu0 0.0
    %630 = vmatpush2.msra.mxu0 0.0
    %631 = vmatprep.subr.mxu0 0.0
    %632 = vmatpush2.msra.mxu0 0.0
    %633 = vmatprep.subr.mxu0 0.0
    %634 = vmatpush2.msra.mxu0 0.0
    %635 = vmatprep.subr.mxu0 0.0
    %636 = vmatpush2.msra.mxu0 0.0
    %637 = vmatprep.subr.mxu0 0.0
    %638 = vmatpush2.msra.mxu0 0.0
    %639 = vmatprep.subr.mxu0 0.0
    %640 = vmatpush2.msra.mxu0 0.0
    %641 = vmatprep.subr.mxu0 0.0
    %642 = vmatpush2.msra.mxu0 0.0
    %643 = vmatprep.subr.mxu0 0.0
    %644 = vmatpush2.msra.mxu0 0.0
    %645 = vmatprep.subr.mxu0 0.0
    %646 = vmatpush2.msra.mxu0 0.0
    %647 = vmatprep.subr.mxu0 0.0
    %648 = vmatpush2.msra.mxu0 0.0
    %649 = vmatprep.subr.mxu0 0.0
    %650 = vmatpush2.msra.mxu0 0.0
    %651 = vmatprep.subr.mxu0 0.0
    %652 = vmatpush2.msra.mxu0 0.0
    %653 = vmatprep.subr.mxu0 0.0
    %654 = vmatpush2.msra.mxu0 0.0
    %655 = vmatprep.mubr.f32.mxu0 0.0
    %656 = vmatmul.mubr.f32.gmra.mxu0 %v589
    %v657 = vpop.f32.mrf.mxu0
    %v658 = vadd.f32 %v585, %v657
    %v659 = vpop.f32.mrf.mxu0
    %660 = vdwg.mxu0
    %v661 = vmax.f32 %v658, 0.0
    %663 = vset.pattern.permute.xlu0 0
    %664 = vperm.xlu0 %663, %v97
    %v665 = vpop.permute.xlu0 %664
    %v667 = vlaneseq
    %v668 = vshrl.u32 %v667, 7
    %v669 = vsub.s32 0, %v668
    %v670 = vrot.slane %v665, %v669
    %v672 = vsel %vm339, %v96, 0
    %v675 = vsel %vm339, %v661, 0
    %677 = vmatprep.subr.mxu0 0.0
    %678 = vmatpush1.xpose.msra.mxu0 0.0
    %679 = vmatprep.subr.mxu0 0.0
    %680 = vmatpush1.xpose.msra.mxu0 0.0
    %681 = vmatprep.subr.mxu0 0.0
    %682 = vmatpush1.xpose.msra.mxu0 0.0
    %683 = vmatprep.subr.mxu0 0.0
    %684 = vmatpush1.xpose.msra.mxu0 0.0
    %685 = vmatprep.subr.mxu0 0.0
    %686 = vmatpush1.xpose.msra.mxu0 0.0
    %687 = vmatprep.subr.mxu0 0.0
    %688 = vmatpush1.xpose.msra.mxu0 0.0
    %689 = vmatprep.subr.mxu0 0.0
    %690 = vmatpush1.xpose.msra.mxu0 0.0
    %691 = vmatprep.subr.mxu0 0.0
    %692 = vmatpush1.xpose.msra.mxu0 0.0
    %693 = vmatprep.subr.mxu0 0.0
    %694 = vmatpush1.xpose.msra.mxu0 0.0
    %695 = vmatprep.subr.mxu0 0.0
    %696 = vmatpush1.xpose.msra.mxu0 0.0
    %697 = vmatprep.subr.mxu0 0.0
    %698 = vmatpush1.xpose.msra.mxu0 0.0
    %699 = vmatprep.subr.mxu0 0.0
    %700 = vmatpush1.xpose.msra.mxu0 0.0
    %701 = vmatprep.subr.mxu0 0.0
    %702 = vmatpush1.xpose.msra.mxu0 0.0
    %703 = vmatprep.subr.mxu0 0.0
    %704 = vmatpush1.xpose.msra.mxu0 0.0
    %705 = vmatprep.subr.mxu0 0.0
    %706 = vmatpush1.xpose.msra.mxu0 0.0
    %707 = vmatprep.subr.mxu0 0.0
    %708 = vmatpush1.xpose.msra.mxu0 %v675
    %709 = vmatprep.subr.mxu0 0.0
    %710 = vmatpush2.xpose.msra.mxu0 0.0
    %711 = vmatprep.subr.mxu0 0.0
    %712 = vmatpush2.xpose.msra.mxu0 0.0
    %713 = vmatprep.subr.mxu0 0.0
    %714 = vmatpush2.xpose.msra.mxu0 0.0
    %715 = vmatprep.subr.mxu0 0.0
    %716 = vmatpush2.xpose.msra.mxu0 0.0
    %717 = vmatprep.subr.mxu0 0.0
    %718 = vmatpush2.xpose.msra.mxu0 0.0
    %719 = vmatprep.subr.mxu0 0.0
    %720 = vmatpush2.xpose.msra.mxu0 0.0
    %721 = vmatprep.subr.mxu0 0.0
    %722 = vmatpush2.xpose.msra.mxu0 0.0
    %723 = vmatprep.subr.mxu0 0.0
    %724 = vmatpush2.xpose.msra.mxu0 0.0
    %725 = vmatprep.subr.mxu0 0.0
    %726 = vmatpush2.xpose.msra.mxu0 0.0
    %727 = vmatprep.subr.mxu0 0.0
    %728 = vmatpush2.xpose.msra.mxu0 0.0
    %729 = vmatprep.subr.mxu0 0.0
    %730 = vmatpush2.xpose.msra.mxu0 0.0
    %731 = vmatprep.subr.mxu0 0.0
    %732 = vmatpush2.xpose.msra.mxu0 0.0
    %733 = vmatprep.subr.mxu0 0.0
    %734 = vmatpush2.xpose.msra.mxu0 0.0
    %735 = vmatprep.subr.mxu0 0.0
    %736 = vmatpush2.xpose.msra.mxu0 0.0
    %737 = vmatprep.subr.mxu0 0.0
    %738 = vmatpush2.xpose.msra.mxu0 0.0
    %739 = vmatprep.subr.mxu0 0.0
    %740 = vmatpush2.xpose.msra.mxu0 0.0
    %741 = vmatprep.mubr.f32.mxu0 0.0
    %742 = vmatmul.mubr.f32.gmra.mxu0 %v672
    %v743 = vpop.f32.mrf.mxu0
    %v744 = vadd.f32 %v670, %v743
    %v745 = vpop.f32.mrf.mxu0
    %746 = vdwg.mxu0
    %vm747 = vcmask 57344
    %748 = vst.msk [vmem:[#allocation3] sm:$0x1] %vm747, %v744
    // Predicated region
    $region66: #{tpu_custom_call.1} parent=1 // pred_check
      _
    $region67: #{tpu_custom_call.1} parent=1 // pred_check_branch
      %750 = sbr.rel (0) target = $region69
    $region68: #{tpu_custom_call.1} parent=1 // pred_region
      %s752 = ssub.s32 16, 16
      %753 = vsyncadd [#allocation4], %s752
      %s755 = sshll.u32 [#allocation3], 4
      %s756 = int_to_ptr.vmem [resolvable:$true] %s755
      %758 = dma.vmem_to_hbm [thread:$0]  %s756, 16, %s16, [#allocation4]
    $region69: #{tpu_custom_call.1} parent=1 // pred_fallthru
      _
    // Predicated region
    $region70: #{tpu_custom_call.1} parent=1 // pred_check
      _
    $region71: #{tpu_custom_call.1} parent=1 // pred_check_branch
      %760 = sbr.rel (0) target = $region73
    $region72: #{tpu_custom_call.1} parent=1 // pred_region
      %761 = dma.done [#allocation4], 16
    $region73: #{tpu_custom_call.1} parent=1 // pred_fallthru
      _
    %762 = vsyncpa [#allocation4], 1

</llo_original>
